<compile_context>
chip_gen: v6e
topology: v6e:2x2x1
jax: 0.10.0
libtpu: 0.0.40
codegen_flags: <defaults>
</compile_context>

<pallas_src>
import math
import functools
import numpy as np
import jax
import jax.numpy as jnp
from jax.experimental import pallas as pl
from jax.experimental.pallas import tpu as pltpu


LANE = 128  # lane packing width. 256 would better fill v6e/v7x MXUs, but 128 is
            # portable (fills v5e exactly) and the kernel is HBM-bound either way.


# ---------------------------------------------------------------------------
# Deterministic host-side setup: the ToS2Grid basis that e3nn registers as
# buffers `shb` [m, beta, i] and `sha` [alpha, m] with normalization='integral'.
# TODO(synk): e3nn's generated Legendre code may differ by per-m (Condon-
# Shortley) signs; signs are irrelevant for this quadratic loss.
# ---------------------------------------------------------------------------
def _assoc_legendre_norm(lmax, x):
    """Orthonormal associated Legendre Nbar_{l,m}(x) for m>=0.
    Returns [lmax+1, lmax+1, len(x)] (entry [l, m], zero where m > l)."""
    x = np.asarray(x, dtype=np.float64)
    n = x.shape[0]
    s = np.sqrt(np.clip(1.0 - x * x, 0.0, None))
    P = np.zeros((lmax + 1, lmax + 1, n), dtype=np.float64)
    for m in range(lmax + 1):
        pmm = np.ones(n, dtype=np.float64)
        if m > 0:
            dfact = float(math.prod(range(1, 2 * m, 2)))  # (2m-1)!!
            pmm = ((-1.0) ** m) * dfact * s**m
        P[m, m] = pmm
        if m + 1 <= lmax:
            P[m + 1, m] = x * (2 * m + 1) * pmm
        for l in range(m + 2, lmax + 1):
            P[l, m] = (x * (2 * l - 1) * P[l - 1, m] - (l + m - 1) * P[l - 2, m]) / (l - m)
    for l in range(lmax + 1):
        for m in range(l + 1):
            norm = math.sqrt(
                (2 * l + 1) / (4 * math.pi) * math.factorial(l - m) / math.factorial(l + m)
            )
            P[l, m] *= norm
    return P


def _make_s2grid_basis_f64(lmax, res_beta, res_alpha):
    """W[i, b*res_alpha + a] = Y_{l,m}(beta_b, alpha_a), i flattening (l, m)."""
    betas = (np.arange(res_beta) + 0.5) / res_beta * math.pi           # e3nn s2_grid
    alphas = np.arange(res_alpha) / res_alpha * 2 * math.pi
    M = 2 * lmax + 1
    I = (lmax + 1) ** 2
    P = _assoc_legendre_norm(lmax, np.cos(betas))                      # [l, m, B]

    sha = np.zeros((res_alpha, M), dtype=np.float64)
    for mi in range(M):
        m = mi - lmax
        if m < 0:
            sha[:, mi] = math.sqrt(2.0) * np.sin(abs(m) * alphas)
        elif m == 0:
            sha[:, mi] = 1.0
        else:
            sha[:, mi] = math.sqrt(2.0) * np.cos(m * alphas)

    shb = np.zeros((M, res_beta, I), dtype=np.float64)                 # 'integral' => n_l = 1
    for l in range(lmax + 1):
        for m in range(-l, l + 1):
            i = l * l + (m + l)
            shb[lmax + m, :, i] = P[l, abs(m)]

    W = np.einsum("mbi,am->iba", shb, sha).reshape(I, res_beta * res_alpha)
    return W


def make_s2grid_basis(lmax, res_beta, res_alpha):
    return _make_s2grid_basis_f64(lmax, res_beta, res_alpha).astype(np.float32)


@functools.lru_cache(maxsize=None)
def make_s2grid_gram_block(lmax, res_beta, res_alpha, pack):
    """Block-diagonal Gram: kron(eye(pack), W @ W^T), f64 accumulation, f32 out."""
    W = _make_s2grid_basis_f64(lmax, res_beta, res_alpha)
    G = W @ W.T
    if pack > 1:
        G = np.kron(np.eye(pack), G)
    return G.astype(np.float32)


# ---------------------------------------------------------------------------
# Pallas kernel: one grid axis over lane-row tiles.  Per tile: cast+diff (VPU),
# one MXU matmul against the resident block-diagonal Gram, elementwise product,
# sublane-sum to a single (1, L) partial row (XLU).  Ragged tail rows of the
# last tile are zeroed in-kernel (no full-array padding in the wrapper).
# ---------------------------------------------------------------------------
def _make_gridloss_kernel(tile_rows, n_valid_rows, ragged):
    def kernel(xin_ref, xtg_ref, g_ref, out_ref):
        d = xin_ref[...].astype(jnp.float32) - xtg_ref[...].astype(jnp.float32)
        if ragged:
            # Rows past the real array hold unspecified VMEM data; jnp.where
            # scrubs them (including any NaN garbage) before they are used.
            row = jax.lax.broadcasted_iota(jnp.int32, d.shape, 0)
            d = jnp.where(pl.program_id(0) * tile_rows + row < n_valid_rows, d, 0.0)
        t = jnp.dot(d, g_ref[...], preferred_element_type=jnp.float32)
        out_ref[0] = jnp.sum(d * t, axis=0, keepdims=True)             # (1, L) partial
    return kernel


def grid_loss(inp, tgt, lmax, res_beta=100, res_alpha=51, tile_z=16384):
    batch, C, I = inp.shape
    assert I == (lmax + 1) ** 2

    # Lane-dense packing factor: 8 z-rows per 128-wide lane row when I | 128.
    # TODO(synk): when I does not divide 128 (e.g. lmax=2 -> I=9) we fall back
    # to the lane-sparse (Z, I) layout (pack=1); the kernel itself is shared.
    pack = LANE // I if LANE % I == 0 else 1
    L = pack * I

    # Compile-time constant under jit; numpy construction cached across calls.
    G = jnp.asarray(make_s2grid_gram_block(lmax, res_beta, res_alpha, pack))   # (L, L)

    Z = batch * C
    xin = inp.reshape(Z, I)          # NOTE: no .astype() here — bf16 streams as bf16
    xtg = tgt.reshape(Z, I)

    # Pad only to a multiple of the packing factor (and to >= 8 lane rows for
    # tiny inputs).  Zero rows have d == 0 and contribute exactly zero loss.
    Zp = pl.cdiv(Z, pack) * pack
    if Zp < pack * 8:
        Zp = pack * 8
    if Zp != Z:
        xin = jnp.pad(xin, ((0, Zp - Z), (0, 0)))
        xtg = jnp.pad(xtg, ((0, Zp - Z), (0, 0)))

    Z_lane = Zp // pack
    xin = xin.reshape(Z_lane, L)     # free row-major reshape -> lane-dense layout
    xtg = xtg.reshape(Z_lane, L)

    # ---- row-tile choice ----------------------------------------------------
    # Keep each input block at ~2 MiB of VMEM (double-buffered x 2 inputs stays
    # well under the v5e 16 MiB / v7x 32 MiB scoped-VMEM defaults).
    itemsize = jnp.dtype(inp.dtype).itemsize
    bytes_per_row = max(L, 128) * itemsize
    budget_rows = max(8, ((2 * 1024 * 1024) // bytes_per_row) // 8 * 8)
    tile_default = max(8, min(int(tile_z) // pack, budget_rows) // 8 * 8)

    max_tile = (Z_lane // 8) * 8                    # mult-of-8, never exceeds the array
    if Z_lane >= 128:
        # Ensure >= 2 tiles so the 'parallel' grid axis can split across v7x's 2 TCs.
        half = (pl.cdiv(Z_lane, 2) + 7) // 8 * 8
        tile_rows = min(tile_default, half, max_tile)
    else:
        tile_rows = min(tile_default, max_tile)
    tile_rows = max(tile_rows, 8)

    num_tiles = pl.cdiv(Z_lane, tile_rows)
    ragged = (Z_lane % tile_rows) != 0              # mask only compiled in when needed

    partials = pl.pallas_call(
        _make_gridloss_kernel(tile_rows, Z_lane, ragged),
        out_shape=jax.ShapeDtypeStruct((num_tiles, 1, L), jnp.float32),
        grid_spec=pltpu.PrefetchScalarGridSpec(
            num_scalar_prefetch=0,
            grid=(num_tiles,),
            in_specs=[
                pl.BlockSpec((tile_rows, L), lambda i: (i, 0)),
                pl.BlockSpec((tile_rows, L), lambda i: (i, 0)),
                pl.BlockSpec((L, L), lambda i: (0, 0)),   # Gram block stays resident
            ],
            out_specs=pl.BlockSpec((1, 1, L), lambda i: (i, 0, 0)),
        ),
        compiler_params=pltpu.CompilerParams(
            dimension_semantics=("parallel",),            # independent Z tiles
        ),
    )(xin, xtg, G)

    # Tiny final reduction (num_tiles * L floats), then batch mean:
    # loss.sum(dim=(1,2,3)).mean() == total_sum / batch.
    return jnp.sum(partials) / batch


def grid_loss_ref(inp, tgt, lmax, res_beta=100, res_alpha=51):
    """Plain-JAX reference with the exact PyTorch forward structure."""
    batch, C, I = inp.shape
    W = jnp.asarray(make_s2grid_basis(lmax, res_beta, res_alpha))
    gi = jnp.einsum("zi,ig->zg", inp.reshape(-1, I).astype(jnp.float32), W, precision="highest")
    gt = jnp.einsum("zi,ig->zg", tgt.reshape(-1, I).astype(jnp.float32), W, precision="highest")
    gi = gi.reshape(batch, C, res_beta, res_alpha)
    gt = gt.reshape(batch, C, res_beta, res_alpha)
    loss = (gi - gt) ** 2
    return jnp.mean(jnp.sum(loss, axis=(1, 2, 3)))


if __name__ == "__main__":
    lmax = 3
    I = (lmax + 1) ** 2  # 16

    key = jax.random.PRNGKey(0)
    k1, k2, k3, k4 = jax.random.split(key, 4)

    # Case 1: small shape implied by the module (batch=2, channels=4), f32.
    batch, C = 2, 4
    inp = jax.random.normal(k1, (batch, C, I), dtype=jnp.float32)
    tgt = jax.random.normal(k2, (batch, C, I), dtype=jnp.float32)
    loss_fn = jax.jit(functools.partial(grid_loss, lmax=lmax))
    loss = jax.block_until_ready(loss_fn(inp, tgt))
    ref = jax.block_until_ready(grid_loss_ref(inp, tgt, lmax))
    np.testing.assert_allclose(np.asarray(loss), np.asarray(ref), rtol=5e-3, atol=1e-4)

    # Case 2: multi-tile grid with a ragged last tile and bf16 inputs (exercises
    # the in-kernel tail mask and the no-upcast-in-wrapper path).
    batch2, C2 = 4, 50
    inp2 = jax.random.normal(k3, (batch2, C2, I), dtype=jnp.float32)
    tgt2 = jax.random.normal(k4, (batch2, C2, I), dtype=jnp.float32)
    inp2_bf = inp2.astype(jnp.bfloat16)
    tgt2_bf = tgt2.astype(jnp.bfloat16)
    loss2_fn = jax.jit(functools.partial(grid_loss, lmax=lmax, tile_z=128))
    loss2 = jax.block_until_ready(loss2_fn(inp2_bf, tgt2_bf))
    ref2 = jax.block_until_ready(
        grid_loss_ref(inp2_bf.astype(jnp.float32), tgt2_bf.astype(jnp.float32), lmax))
    np.testing.assert_allclose(np.asarray(loss2), np.asarray(ref2), rtol=5e-3, atol=1e-4)

    print("KERNEL_OK")
</pallas_src>

<mosaic_0001>
module attributes {stable_mosaic.version = 11 : i64} {
  func.func @kernel(%arg0: i32, %arg1: memref<8x128xf32, #tpu.memory_space<vmem>>, %arg2: memref<8x128xf32, #tpu.memory_space<vmem>>, %arg3: memref<128x128xf32, #tpu.memory_space<vmem>>, %arg4: memref<1x1x128xf32, #tpu.memory_space<vmem>>) attributes {dimension_semantics = [#tpu.dimension_semantics<parallel>], iteration_bounds = array<i64: 1>, scalar_prefetch = 0 : i64, scratch_operands = 0 : i64, tpu.core_type = #tpu.core_type<tc>, window_params = [{transform_indices = @transform_0, window_bounds = array<i64: 8, 128>}, {transform_indices = @transform_1, window_bounds = array<i64: 8, 128>}, {pipeline_mode = #tpu.pipeline_mode<synchronous>, transform_indices = @transform_2, window_bounds = array<i64: 128, 128>}, {transform_indices = @transform_3, window_bounds = array<i64: 1, 1, 128>}]} {
    %c0 = arith.constant 0 : index
    %c0_0 = arith.constant 0 : index
    %0 = vector.load %arg1[%c0, %c0_0] : memref<8x128xf32, #tpu.memory_space<vmem>>, vector<8x128xf32>
    %c0_1 = arith.constant 0 : index
    %c0_2 = arith.constant 0 : index
    %1 = vector.load %arg2[%c0_1, %c0_2] : memref<8x128xf32, #tpu.memory_space<vmem>>, vector<8x128xf32>
    %2 = arith.subf %0, %1 : vector<8x128xf32>
    %c0_3 = arith.constant 0 : index
    %c0_4 = arith.constant 0 : index
    %3 = vector.load %arg3[%c0_3, %c0_4] : memref<128x128xf32, #tpu.memory_space<vmem>>, vector<128x128xf32>
    %cst = arith.constant dense<0.000000e+00> : vector<8x128xf32>
    %4 = tpu.matmul %2, %3, %cst {dimension_numbers = #tpu.dot_dimension_numbers<[1], [0], [0], [1], [0, 0, 1, 1], [], []>} : vector<8x128xf32>, vector<128x128xf32>, vector<8x128xf32> -> vector<8x128xf32>
    %5 = arith.mulf %2, %4 : vector<8x128xf32>
    %cst_5 = arith.constant dense<0.000000e+00> : vector<128xf32>
    %6 = vector.multi_reduction <add>, %5, %cst_5 [0] : vector<8x128xf32> to vector<128xf32>
    %7 = vector.shape_cast %6 : vector<128xf32> to vector<1x128xf32>
    %c0_6 = arith.constant 0 : index
    %c0_7 = arith.constant 0 : index
    %c0_8 = arith.constant 0 : index
    %8 = vector.load %arg4[%c0_6, %c0_7, %c0_8] : memref<1x1x128xf32, #tpu.memory_space<vmem>>, vector<1x1x128xf32>
    %9 = vector.shape_cast %8 : vector<1x1x128xf32> to vector<1x128xf32>
    %10 = vector.shape_cast %7 : vector<1x128xf32> to vector<1x1x128xf32>
    tpu.vector_store %arg4[%c0_6, %c0_7, %c0_8], %10 {strides = array<i32>} : memref<1x1x128xf32, #tpu.memory_space<vmem>>, vector<1x1x128xf32>,
    return
  }
  func.func @transform_0(%arg0: i32) -> (i32, i32) {
    %c0_i32 = arith.constant 0 : i32
    %c0_i32_0 = arith.constant 0 : i32
    return %arg0, %c0_i32 : i32, i32
  }
  func.func @transform_1(%arg0: i32) -> (i32, i32) {
    %c0_i32 = arith.constant 0 : i32
    %c0_i32_0 = arith.constant 0 : i32
    return %arg0, %c0_i32 : i32, i32
  }
  func.func @transform_2(%arg0: i32) -> (i32, i32) {
    %c0_i32 = arith.constant 0 : i32
    %c0_i32_0 = arith.constant 0 : i32
    %c0_i32_1 = arith.constant 0 : i32
    return %c0_i32, %c0_i32_0 : i32, i32
  }
  func.func @transform_3(%arg0: i32) -> (i32, i32, i32) {
    %c0_i32 = arith.constant 0 : i32
    %c0_i32_0 = arith.constant 0 : i32
    %c0_i32_1 = arith.constant 0 : i32
    return %arg0, %c0_i32, %c0_i32_0 : i32, i32, i32
  }
}

</mosaic_0001>

<llo_original>
// kernel: grid_loss.1
$region0: #{grid_loss.1}
  #allocation0 [shape = 'u32[]', space=smem, size = 0x4, offset = 0x4, fixed_abs, tag = 'smem constant byte address 0x4 - core index']
  #allocation1 [shape = 'u32[144,128]{1,0:T(1,128)}', space=vmem, size = 0x12000, scoped, tag = 'internal scratch']
  %s0 = inlined_call_operand.vmem [shape: f32[8,128], index: 0, kind: input, shape index: {}]
  %s1 = inlined_call_operand.vmem [shape: f32[8,128], index: 1, kind: input, shape index: {}]
  %s2 = inlined_call_operand.vmem [shape: f32[128,128], index: 2, kind: input, shape index: {}]
  %s3 = inlined_call_operand.vmem [shape: f32[1,1,128], index: 3, kind: output, shape index: {}]
  %s4 = sld [smem:[#allocation0]]
  $region22: #{grid_loss.1} parent=0
    _
  %s6 = ssub.s32 1, %s4
  %s7 = scalar_select 0, %s6, %s4
  // Predicated region
  $region2: #{grid_loss.1} parent=0 // pred_check
    _
  $region3: #{grid_loss.1} parent=0 // pred_check_branch
    %9 = sbr.rel (0) target = $region5
  $region4: #{grid_loss.1} parent=0 // pred_region
    _
  $region5: #{grid_loss.1} parent=0 // pred_fallthru
    _
  // Predicated region
  $region6: #{grid_loss.1} parent=0 // pred_check
    _
  $region7: #{grid_loss.1} parent=0 // pred_check_branch
    %11 = sbr.rel (0) target = $region9
  $region8: #{grid_loss.1} parent=0 // pred_region
    _
  $region9: #{grid_loss.1} parent=0 // pred_fallthru
    _
  // Predicated region
  $region10: #{grid_loss.1} parent=0 // pred_check
    _
  $region11: #{grid_loss.1} parent=0 // pred_check_branch
    %13 = sbr.rel (0) target = $region13
  $region12: #{grid_loss.1} parent=0 // pred_region
    _
  $region13: #{grid_loss.1} parent=0 // pred_fallthru
    _
  %v14 = vld [vmem:[%s0] sm:$0xff]
  %v15 = vld [vmem:[%s1] sm:$0xff]
  %v16 = vsub.f32 %v14, %v15
  %v17 = vld [vmem:[%s2] sm:$0xff]
  %v18 = vld [vmem:[%s2 + $0x8] sm:$0xff]
  %v19 = vld [vmem:[%s2 + $0x10] sm:$0xff]
  %v20 = vld [vmem:[%s2 + $0x18] sm:$0xff]
  %v21 = vld [vmem:[%s2 + $0x20] sm:$0xff]
  %v22 = vld [vmem:[%s2 + $0x28] sm:$0xff]
  %v23 = vld [vmem:[%s2 + $0x30] sm:$0xff]
  %v24 = vld [vmem:[%s2 + $0x38] sm:$0xff]
  %v25 = vld [vmem:[%s2 + $0x40] sm:$0xff]
  %v26 = vld [vmem:[%s2 + $0x48] sm:$0xff]
  %v27 = vld [vmem:[%s2 + $0x50] sm:$0xff]
  %v28 = vld [vmem:[%s2 + $0x58] sm:$0xff]
  %v29 = vld [vmem:[%s2 + $0x60] sm:$0xff]
  %v30 = vld [vmem:[%s2 + $0x68] sm:$0xff]
  %v31 = vld [vmem:[%s2 + $0x70] sm:$0xff]
  %v32 = vld [vmem:[%s2 + $0x78] sm:$0xff]
  %33 = vmatprep.subr.mxu0 0.0
  %34 = vmatpush1.msra.mxu0 %v32
  %35 = vmatprep.subr.mxu0 0.0
  %36 = vmatpush1.msra.mxu0 %v31
  %37 = vmatprep.subr.mxu0 0.0
  %38 = vmatpush1.msra.mxu0 %v30
  %39 = vmatprep.subr.mxu0 0.0
  %40 = vmatpush1.msra.mxu0 %v29
  %41 = vmatprep.subr.mxu0 0.0
  %42 = vmatpush1.msra.mxu0 %v28
  %43 = vmatprep.subr.mxu0 0.0
  %44 = vmatpush1.msra.mxu0 %v27
  %45 = vmatprep.subr.mxu0 0.0
  %46 = vmatpush1.msra.mxu0 %v26
  %47 = vmatprep.subr.mxu0 0.0
  %48 = vmatpush1.msra.mxu0 %v25
  %49 = vmatprep.subr.mxu0 0.0
  %50 = vmatpush1.msra.mxu0 %v24
  %51 = vmatprep.subr.mxu0 0.0
  %52 = vmatpush1.msra.mxu0 %v23
  %53 = vmatprep.subr.mxu0 0.0
  %54 = vmatpush1.msra.mxu0 %v22
  %55 = vmatprep.subr.mxu0 0.0
  %56 = vmatpush1.msra.mxu0 %v21
  %57 = vmatprep.subr.mxu0 0.0
  %58 = vmatpush1.msra.mxu0 %v20
  %59 = vmatprep.subr.mxu0 0.0
  %60 = vmatpush1.msra.mxu0 %v19
  %61 = vmatprep.subr.mxu0 0.0
  %62 = vmatpush1.msra.mxu0 %v18
  %63 = vmatprep.subr.mxu0 0.0
  %64 = vmatpush1.msra.mxu0 %v17
  %65 = vmatprep.subr.mxu0 0.0
  %66 = vmatpush2.msra.mxu0 0.0
  %67 = vmatprep.subr.mxu0 0.0
  %68 = vmatpush2.msra.mxu0 0.0
  %69 = vmatprep.subr.mxu0 0.0
  %70 = vmatpush2.msra.mxu0 0.0
  %71 = vmatprep.subr.mxu0 0.0
  %72 = vmatpush2.msra.mxu0 0.0
  %73 = vmatprep.subr.mxu0 0.0
  %74 = vmatpush2.msra.mxu0 0.0
  %75 = vmatprep.subr.mxu0 0.0
  %76 = vmatpush2.msra.mxu0 0.0
  %77 = vmatprep.subr.mxu0 0.0
  %78 = vmatpush2.msra.mxu0 0.0
  %79 = vmatprep.subr.mxu0 0.0
  %80 = vmatpush2.msra.mxu0 0.0
  %81 = vmatprep.subr.mxu0 0.0
  %82 = vmatpush2.msra.mxu0 0.0
  %83 = vmatprep.subr.mxu0 0.0
  %84 = vmatpush2.msra.mxu0 0.0
  %85 = vmatprep.subr.mxu0 0.0
  %86 = vmatpush2.msra.mxu0 0.0
  %87 = vmatprep.subr.mxu0 0.0
  %88 = vmatpush2.msra.mxu0 0.0
  %89 = vmatprep.subr.mxu0 0.0
  %90 = vmatpush2.msra.mxu0 0.0
  %91 = vmatprep.subr.mxu0 0.0
  %92 = vmatpush2.msra.mxu0 0.0
  %93 = vmatprep.subr.mxu0 0.0
  %94 = vmatpush2.msra.mxu0 0.0
  %95 = vmatprep.subr.mxu0 0.0
  %96 = vmatpush2.msra.mxu0 0.0
  %97 = vmatprep.mubr.f32.mxu0 0.0
  %98 = vmatmul.mubr.f32.gmra.mxu0 %v16
  %v99 = vpop.f32.mrf.mxu0
  %v100 = vadd.f32 0.0, %v99
  %v101 = vpop.f32.mrf.mxu0
  %102 = vdwg.mxu0
  %v103 = vmul.f32 %v16, %v100
  %v104 = vrot.slane %v103, 4
  %v105 = vadd.f32 %v103, %v104
  %v106 = vrot.slane %v105, 2
  %v107 = vadd.f32 %v105, %v106
  %v108 = vrot.slane %v107, 1
  %v109 = vadd.f32 %v107, %v108
  %110 = vst [vmem:[%s3] sm:$0x1] %v109
  // Predicated region
  $region14: #{grid_loss.1} parent=0 // pred_check
    _
  $region15: #{grid_loss.1} parent=0 // pred_check_branch
    %112 = sbr.rel (0) target = $region17
  $region16: #{grid_loss.1} parent=0 // pred_region
    _
  $region17: #{grid_loss.1} parent=0 // pred_fallthru
    _
  // Predicated region
  $region18: #{grid_loss.1} parent=0 // pred_check
    _
  $region19: #{grid_loss.1} parent=0 // pred_check_branch
    %114 = sbr.rel (0) target = $region21
  $region20: #{grid_loss.1} parent=0 // pred_region
    _
  $region21: #{grid_loss.1} parent=0 // pred_fallthru
    _

</llo_original>
